<compile_context>
chip_gen: v6e
topology: v6e:2x2x1
jax: 0.10.0
libtpu: 0.0.40
codegen_flags: <defaults>
</compile_context>

<pallas_src>
import numpy as np
import jax
import jax.numpy as jnp
from jax import lax
from jax.experimental import pallas as pl
from jax.experimental.pallas import tpu as pltpu


# ----------------------------------------------------------------------------
# Host-side helpers
# ----------------------------------------------------------------------------
def _adaptive_pool_matrix(in_size: int, out_size: int) -> np.ndarray:
    """Row i averages input[start_i:end_i], matching nn.AdaptiveAvgPool2d."""
    m = np.zeros((out_size, in_size), np.float32)
    for i in range(out_size):
        start = (i * in_size) // out_size
        end = -(-((i + 1) * in_size) // out_size)  # ceil
        m[i, start:end] = 1.0 / float(end - start)
    return m


def _round_up(x: int, m: int) -> int:
    return -(-x // m) * m


def _pick_hw_chunk(hw: int, cin: int, max_chunk_bytes: int) -> int:
    """Pick the H*W tile width TK.

    Budget ~max_chunk_bytes of f32 activation per chunk (double-buffered by
    the Pallas pipeline).  Prefer a multiple of 128 that divides H*W exactly
    (no tail masking); otherwise fall back to the largest 128-multiple within
    budget and let the kernel zero-mask the partial tail chunk (cdiv grid).
    """
    max_tk = max(max_chunk_bytes // (cin * 4), 128)
    if hw <= max_tk:
        return hw                       # single chunk; block == full array dim
    tk_cap = (max_tk // 128) * 128
    for tk in range(tk_cap, 127, -128):
        if hw % tk == 0:
            return tk
    return tk_cap


# ----------------------------------------------------------------------------
# Wrapper + kernel
# ----------------------------------------------------------------------------
def upernet_pyramid_pooling_block(x_nchw, params, pool_scale: int,
                                  *, max_chunk_bytes: int = 8 * 1024 * 1024):
    """x_nchw: (N, Cin, H, W) float32.  Returns (N, Cout, S, S) float32."""
    N, Cin, H, W = x_nchw.shape
    S = pool_scale
    SS = S * S
    SSp = _round_up(SS, 8)                       # sublane-aligned pooled rows

    w = params["conv_w"]                         # (Cin, Cout) f32
    Cout = w.shape[1]
    Coutp = _round_up(Cout, 128)                 # lane-dense output channels

    # Fold eval-mode BatchNorm into the 1x1 conv (scale -> weight, rest -> shift).
    eps = 1e-5
    bn_scale = params["bn_gamma"] / jnp.sqrt(params["bn_var"] + eps)   # (Cout,)
    bn_shift = params["bn_beta"] - params["bn_mean"] * bn_scale        # (Cout,)
    w_fold = w * bn_scale[None, :]
    w_fold = jnp.pad(w_fold, ((0, 0), (0, Coutp - Cout))).astype(jnp.bfloat16)
    shift = jnp.pad(bn_shift, (0, Coutp - Cout)).reshape(1, Coutp)
    shift = shift.astype(jnp.float32)            # padded channels: relu(0+0)=0

    HW = H * W
    TK = _pick_hw_chunk(HW, Cin, max_chunk_bytes)
    nk = pl.cdiv(HW, TK)
    tail = HW % TK                               # valid cols in last chunk (0 = full)

    # Adaptive-avg-pool matrix over flattened H*W.  Rows padded to SSp,
    # columns zero-padded to nk*TK (padded cols pair with the zero-masked x
    # tail, so they contribute nothing).  bf16 so the MXU runs its native path.
    ph = _adaptive_pool_matrix(H, S)             # (S, H)
    pw = _adaptive_pool_matrix(W, S)             # (S, W)
    p = np.einsum("ih,jw->ijhw", ph, pw).reshape(SS, HW)
    p = np.pad(p, ((0, SSp - SS), (0, nk * TK - HW)))
    p = jnp.asarray(p, jnp.bfloat16)

    # Native layout and dtype: reshape only (free), no transpose / cast pass.
    x_flat = x_nchw.reshape(N, Cin, HW)

    def kernel(x_ref, p_ref, w_ref, shift_ref, o_ref, acc_ref):
        # x_ref:     (1, Cin, TK)    f32   H*W chunk of the native-layout input
        # p_ref:     (SSp, TK)       bf16  adaptive-avg-pool matrix chunk
        # w_ref:     (Cin, Coutp)    bf16  1x1 conv weight with BN scale folded
        # shift_ref: (1, Coutp)      f32   folded BN shift (beta - mean*scale)
        # o_ref:     (1, SSp, Coutp) f32   lane-dense output block
        # acc_ref:   (SSp, Cin)      f32   pooled-feature accumulator (scratch)
        k = pl.program_id(1)

        @pl.when(k == 0)
        def _():
            acc_ref[...] = jnp.zeros_like(acc_ref)

        xb = x_ref[0].astype(jnp.bfloat16)                     # (Cin, TK)
        if tail:
            # Partial tail chunk: zero the out-of-range columns so OOB garbage
            # left behind by the clamped DMA never reaches the MXU.  Only
            # emitted when H*W is not a multiple of TK.
            col = lax.broadcasted_iota(jnp.int32, (1, TK), 1)
            valid = jnp.minimum(HW - k * TK, TK)
            xb = jnp.where(col < valid, xb, 0.0)

        # Partial adaptive average pool: one fat bf16 MXU contraction
        # P(SSp,TK) . X(Cin,TK)^T, accumulated in f32.
        acc_ref[...] += lax.dot_general(
            p_ref[...], xb,
            dimension_numbers=(((1,), (1,)), ((), ())),
            preferred_element_type=jnp.float32)

        @pl.when(k == pl.num_programs(1) - 1)
        def _():
            pooled = acc_ref[...].astype(jnp.bfloat16)         # (SSp, Cin)
            y = jnp.dot(pooled, w_ref[...],
                        preferred_element_type=jnp.float32)    # (SSp, Coutp)
            o_ref[0] = jnp.maximum(y + shift_ref[...], 0.0).astype(o_ref.dtype)

    # Provision scoped VMEM for the double-buffered working set + in-kernel
    # temps (bf16 cast of the x chunk), with headroom; stays well under v7x's
    # 64 MiB physical VMEM.
    vmem_bytes = (
        2 * Cin * TK * 4                          # x chunk (double-buffered, f32)
        + 2 * Cin * TK * 2                        # bf16 cast temp + mask headroom
        + 2 * SSp * TK * 2                        # pool-matrix chunk
        + 2 * Cin * Coutp * 2                     # folded conv weight
        + 2 * 8 * Coutp * 4                       # shift (sublane-padded)
        + 2 * SSp * Coutp * 4                     # output block
        + SSp * _round_up(Cin, 128) * 4           # accumulator scratch
    )
    vmem_limit = int(min(max(int(vmem_bytes * 1.4) + (4 << 20), 32 << 20), 48 << 20))

    out = pl.pallas_call(
        kernel,
        out_shape=jax.ShapeDtypeStruct((N, SSp, Coutp), jnp.float32),
        grid_spec=pltpu.PrefetchScalarGridSpec(
            num_scalar_prefetch=0,
            grid=(N, nk),
            in_specs=[
                pl.BlockSpec((1, Cin, TK), lambda n, k: (n, 0, k)),
                pl.BlockSpec((SSp, TK), lambda n, k: (0, k)),
                pl.BlockSpec((Cin, Coutp), lambda n, k: (0, 0)),
                pl.BlockSpec((1, Coutp), lambda n, k: (0, 0)),
            ],
            out_specs=pl.BlockSpec((1, SSp, Coutp), lambda n, k: (n, 0, 0)),
            scratch_shapes=[pltpu.VMEM((SSp, Cin), jnp.float32)],
        ),
        compiler_params=pltpu.CompilerParams(
            dimension_semantics=("parallel", "arbitrary"),
            vmem_limit_bytes=vmem_limit),
    )(x_flat, p, w_fold, shift)

    # Strip padding, back to PyTorch NCHW convention (tiny output, cheap).
    out = out[:, :SS, :Cout].reshape(N, S, S, Cout)
    return jnp.transpose(out, (0, 3, 1, 2))


# ----------------------------------------------------------------------------
# Pure-JAX reference (PyTorch semantics, f32 throughout)
# ----------------------------------------------------------------------------
def reference_forward(x_nchw, params, pool_scale: int):
    x = x_nchw.astype(jnp.float32)
    ph = jnp.asarray(_adaptive_pool_matrix(x.shape[2], pool_scale))
    pw = jnp.asarray(_adaptive_pool_matrix(x.shape[3], pool_scale))
    pooled = jnp.einsum("ih,nchw->nciw", ph, x)
    pooled = jnp.einsum("jw,nciw->ncij", pw, pooled)
    y = jnp.einsum("ncij,cl->nlij", pooled, params["conv_w"])
    eps = 1e-5
    sc = params["bn_gamma"] / jnp.sqrt(params["bn_var"] + eps)
    sh = params["bn_beta"] - params["bn_mean"] * sc
    y = y * sc[None, :, None, None] + sh[None, :, None, None]
    return jnp.maximum(y, 0.0)


# ----------------------------------------------------------------------------
# Test
# ----------------------------------------------------------------------------
def _make_params(key, cin, cout):
    ks = jax.random.split(key, 5)
    conv_w_oihw = 0.05 * jax.random.normal(ks[0], (cout, cin, 1, 1), jnp.float32)
    return {
        "conv_w": jnp.transpose(conv_w_oihw[:, :, 0, 0], (1, 0)),  # (Cin, Cout)
        "bn_gamma": 1.0 + 0.1 * jax.random.normal(ks[1], (cout,), jnp.float32),
        "bn_beta": 0.1 * jax.random.normal(ks[2], (cout,), jnp.float32),
        "bn_mean": 0.1 * jax.random.normal(ks[3], (cout,), jnp.float32),
        "bn_var": jnp.abs(1.0 + 0.1 * jax.random.normal(ks[4], (cout,), jnp.float32)),
    }


def _run_case(key, n, cin, h, w, cout, pool_scale,
              max_chunk_bytes=8 * 1024 * 1024):
    kx, kp = jax.random.split(key)
    x = jax.random.normal(kx, (n, cin, h, w), jnp.float32)
    params = _make_params(kp, cin, cout)
    out = jax.block_until_ready(
        upernet_pyramid_pooling_block(x, params, pool_scale,
                                      max_chunk_bytes=max_chunk_bytes))
    assert out.shape == (n, cout, pool_scale, pool_scale), out.shape
    ref = jax.block_until_ready(reference_forward(x, params, pool_scale))
    # bf16 streaming / bf16 pool-matrix with f32 accumulation: ~1% worst-case
    # deviation from the f32 PyTorch reference (documented tolerance).
    np.testing.assert_allclose(np.asarray(out), np.asarray(ref),
                               rtol=2e-2, atol=3e-3)


if __name__ == "__main__":
    key = jax.random.PRNGKey(0)
    k1, k2, k3 = jax.random.split(key, 3)

    # Case A: multi-chunk H*W reduction (HW=1024, forced TK=512 -> 2 chunks)
    # and SS padding (pool_scale=2 -> SS=4 padded to 8 sublane rows).
    _run_case(k1, n=2, cin=32, h=32, w=32, cout=64, pool_scale=2,
              max_chunk_bytes=64 * 1024)

    # Case B: single-chunk path, non-aligned Cin/Cout, overlapping pool regions.
    _run_case(k2, n=2, cin=48, h=16, w=16, cout=96, pool_scale=3)

    # Case C: cdiv grid with a zero-masked partial tail chunk
    # (HW=400, TK=128 -> 4 chunks, tail=16) and pool_scale=6 (SS=36 -> 40 rows).
    _run_case(k3, n=1, cin=32, h=20, w=20, cout=64, pool_scale=6,
              max_chunk_bytes=16 * 1024)

    print("KERNEL_OK")
</pallas_src>

<mosaic_0001>
module attributes {stable_mosaic.version = 11 : i64} {
  func.func @kernel(%arg0: i32, %arg1: i32, %arg2: memref<1x32x512xf32, #tpu.memory_space<vmem>>, %arg3: memref<8x512xbf16, #tpu.memory_space<vmem>>, %arg4: memref<32x128xbf16, #tpu.memory_space<vmem>>, %arg5: memref<1x128xf32, #tpu.memory_space<vmem>>, %arg6: memref<1x8x128xf32, #tpu.memory_space<vmem>>, %arg7: memref<8x32xf32, #tpu.memory_space<vmem>>) attributes {dimension_semantics = [#tpu.dimension_semantics<parallel>, #tpu.dimension_semantics<arbitrary>], iteration_bounds = array<i64: 2, 2>, scalar_prefetch = 0 : i64, scratch_operands = 1 : i64, tpu.core_type = #tpu.core_type<tc>, window_params = [{transform_indices = @transform_0, window_bounds = array<i64: 1, 32, 512>}, {transform_indices = @transform_1, window_bounds = array<i64: 8, 512>}, {pipeline_mode = #tpu.pipeline_mode<synchronous>, transform_indices = @transform_2, window_bounds = array<i64: 32, 128>}, {pipeline_mode = #tpu.pipeline_mode<synchronous>, transform_indices = @transform_3, window_bounds = array<i64: 1, 128>}, {transform_indices = @transform_4, window_bounds = array<i64: 1, 8, 128>}]} {
    %c0_i32 = arith.constant 0 : i32
    %0 = arith.cmpi eq, %arg1, %c0_i32 : i32
    %1 = arith.extui %0 : i1 to i32
    %c0_i32_0 = arith.constant 0 : i32
    %2 = arith.cmpi ne, %1, %c0_i32_0 : i32
    scf.if %2 {
      %cst_10 = arith.constant 0.000000e+00 : f32
      %14 = vector.broadcast %cst_10 : f32 to vector<8x32xf32>
      %c0_11 = arith.constant 0 : index
      %c0_12 = arith.constant 0 : index
      %15 = vector.load %arg7[%c0_11, %c0_12] : memref<8x32xf32, #tpu.memory_space<vmem>>, vector<8x32xf32>
      tpu.vector_store %arg7[%c0_11, %c0_12], %14 {strides = array<i32>} : memref<8x32xf32, #tpu.memory_space<vmem>>, vector<8x32xf32>,
    } else {
    }
    %c0 = arith.constant 0 : index
    %c0_1 = arith.constant 0 : index
    %c0_2 = arith.constant 0 : index
    %3 = vector.load %arg2[%c0, %c0_1, %c0_2] : memref<1x32x512xf32, #tpu.memory_space<vmem>>, vector<1x32x512xf32>
    %4 = vector.shape_cast %3 : vector<1x32x512xf32> to vector<32x512xf32>
    %5 = arith.truncf %4 : vector<32x512xf32> to vector<32x512xbf16>
    %c0_3 = arith.constant 0 : index
    %c0_4 = arith.constant 0 : index
    %6 = vector.load %arg7[%c0_3, %c0_4] : memref<8x32xf32, #tpu.memory_space<vmem>>, vector<8x32xf32>
    %c0_5 = arith.constant 0 : index
    %c0_6 = arith.constant 0 : index
    %7 = vector.load %arg3[%c0_5, %c0_6] : memref<8x512xbf16, #tpu.memory_space<vmem>>, vector<8x512xbf16>
    %cst = arith.constant dense<0.000000e+00> : vector<8x32xf32>
    %8 = tpu.matmul %7, %5, %cst {dimension_numbers = #tpu.dot_dimension_numbers<[1], [1], [0], [0], [0, 0, 1, 0], [], []>} : vector<8x512xbf16>, vector<32x512xbf16>, vector<8x32xf32> -> vector<8x32xf32>
    %9 = arith.addf %6, %8 : vector<8x32xf32>
    %c0_7 = arith.constant 0 : index
    %c0_8 = arith.constant 0 : index
    %10 = vector.load %arg7[%c0_7, %c0_8] : memref<8x32xf32, #tpu.memory_space<vmem>>, vector<8x32xf32>
    tpu.vector_store %arg7[%c0_7, %c0_8], %9 {strides = array<i32>} : memref<8x32xf32, #tpu.memory_space<vmem>>, vector<8x32xf32>,
    %c1_i32 = arith.constant 1 : i32
    %11 = arith.cmpi eq, %arg1, %c1_i32 : i32
    %12 = arith.extui %11 : i1 to i32
    %c0_i32_9 = arith.constant 0 : i32
    %13 = arith.cmpi ne, %12, %c0_i32_9 : i32
    scf.if %13 {
      %c0_10 = arith.constant 0 : index
      %c0_11 = arith.constant 0 : index
      %14 = vector.load %arg7[%c0_10, %c0_11] : memref<8x32xf32, #tpu.memory_space<vmem>>, vector<8x32xf32>
      %15 = arith.truncf %14 : vector<8x32xf32> to vector<8x32xbf16>
      %c0_12 = arith.constant 0 : index
      %c0_13 = arith.constant 0 : index
      %16 = vector.load %arg4[%c0_12, %c0_13] : memref<32x128xbf16, #tpu.memory_space<vmem>>, vector<32x128xbf16>
      %cst_14 = arith.constant dense<0.000000e+00> : vector<8x128xf32>
      %17 = tpu.matmul %15, %16, %cst_14 {dimension_numbers = #tpu.dot_dimension_numbers<[1], [0], [0], [1], [0, 0, 1, 1], [], []>} : vector<8x32xbf16>, vector<32x128xbf16>, vector<8x128xf32> -> vector<8x128xf32>
      %c0_15 = arith.constant 0 : index
      %c0_16 = arith.constant 0 : index
      %18 = vector.load %arg5[%c0_15, %c0_16] : memref<1x128xf32, #tpu.memory_space<vmem>>, vector<1x128xf32>
      %19 = vector.broadcast %18 : vector<1x128xf32> to vector<8x128xf32>
      %20 = arith.addf %17, %19 : vector<8x128xf32>
      %cst_17 = arith.constant 0.000000e+00 : f32
      %21 = vector.broadcast %cst_17 : f32 to vector<8x128xf32>
      %22 = arith.maximumf %20, %21 : vector<8x128xf32>
      %c0_18 = arith.constant 0 : index
      %c0_19 = arith.constant 0 : index
      %c0_20 = arith.constant 0 : index
      %23 = vector.load %arg6[%c0_18, %c0_19, %c0_20] : memref<1x8x128xf32, #tpu.memory_space<vmem>>, vector<1x8x128xf32>
      %24 = vector.shape_cast %23 : vector<1x8x128xf32> to vector<8x128xf32>
      %25 = vector.shape_cast %22 : vector<8x128xf32> to vector<1x8x128xf32>
      tpu.vector_store %arg6[%c0_18, %c0_19, %c0_20], %25 {strides = array<i32>} : memref<1x8x128xf32, #tpu.memory_space<vmem>>, vector<1x8x128xf32>,
    } else {
    }
    return
  }
  func.func @transform_0(%arg0: i32, %arg1: i32) -> (i32, i32, i32) {
    %c0_i32 = arith.constant 0 : i32
    %c0_i32_0 = arith.constant 0 : i32
    return %arg0, %c0_i32, %arg1 : i32, i32, i32
  }
  func.func @transform_1(%arg0: i32, %arg1: i32) -> (i32, i32) {
    %c0_i32 = arith.constant 0 : i32
    %c0_i32_0 = arith.constant 0 : i32
    return %c0_i32, %arg1 : i32, i32
  }
  func.func @transform_2(%arg0: i32, %arg1: i32) -> (i32, i32) {
    %c0_i32 = arith.constant 0 : i32
    %c0_i32_0 = arith.constant 0 : i32
    %c0_i32_1 = arith.constant 0 : i32
    return %c0_i32, %c0_i32_0 : i32, i32
  }
  func.func @transform_3(%arg0: i32, %arg1: i32) -> (i32, i32) {
    %c0_i32 = arith.constant 0 : i32
    %c0_i32_0 = arith.constant 0 : i32
    %c0_i32_1 = arith.constant 0 : i32
    return %c0_i32, %c0_i32_0 : i32, i32
  }
  func.func @transform_4(%arg0: i32, %arg1: i32) -> (i32, i32, i32) {
    %c0_i32 = arith.constant 0 : i32
    %c0_i32_0 = arith.constant 0 : i32
    %c0_i32_1 = arith.constant 0 : i32
    return %arg0, %c0_i32, %c0_i32_0 : i32, i32, i32
  }
}

</mosaic_0001>

<llo_original>
// kernel: tpu_custom_call.1
$region0: #{tpu_custom_call.1}
  #allocation0 [shape = 'u32[]', space=smem, size = 0x4, offset = 0x4, fixed_abs, tag = 'smem constant byte address 0x4 - core index']
  #allocation1 [shape = 'u32[144,128]{1,0:T(1,128)}', space=vmem, size = 0x12000, scoped, tag = 'internal scratch']
  #allocation2 [shape = 'f32[8,32]{1,0:T(8,128)}', space=vmem, size = 0x1000, scoped, tag = 'scratch operand']
  %s0 = inlined_call_operand.hbm [shape: f32[2,32,1024], index: 0, kind: input, shape index: {}]
  %s1 = inlined_call_operand.hbm [shape: bf16[8,1024], index: 1, kind: input, shape index: {}]
  %s2 = inlined_call_operand.hbm [shape: bf16[32,128], index: 2, kind: input, shape index: {}]
  %s3 = inlined_call_operand.vmem [shape: f32[1,128], index: 3, kind: input, shape index: {}]
  %s4 = inlined_call_operand.hbm [shape: f32[2,8,128], index: 4, kind: output, shape index: {}]
  %s5 = sld [smem:[#allocation0]]
  $region69: #{tpu_custom_call.1} parent=0
    _
  %s7 = ssub.s32 1, %s5
  %s8 = scalar_select 0, %s7, %s5
  $region1: #{tpu_custom_call.1} parent=0
    #allocation3 [shape = 'u8[131072]{0}', space=vmem, size = 0x20000, scoped, tag = 'input window, operand 0']
    #allocation4 [shape = 's32[2]{0}', space=sflag, size = 0x8, scoped, tag = 'scoped memory for tpu_custom_call.1']
    #allocation5 [shape = 's32[2]{0}', space=sflag, size = 0x8, scoped, tag = 'scoped memory for tpu_custom_call.1']
    #allocation6 [shape = 'u8[16384]{0}', space=vmem, size = 0x4000, scoped, tag = 'input window, operand 1']
    #allocation7 [shape = 's32[2]{0}', space=sflag, size = 0x8, scoped, tag = 'scoped memory for tpu_custom_call.1']
    #allocation8 [shape = 'u8[8192]{0}', space=vmem, size = 0x2000, scoped, tag = 'input window, operand 2, single buffered']
    #allocation9 [shape = 'u8[8192]{0}', space=vmem, size = 0x2000, scoped, tag = 'output window, operand 0']
    %9 = vsyncpa [#allocation4], 0
    %s10 = scalar_lea.sflag [#allocation4], 1
    %11 = vsyncpa %s10, 0
    %12 = vsyncpa [#allocation7], 0
    %s13 = scalar_lea.sflag [#allocation7], 1
    %14 = vsyncpa %s13, 0
    %15 = vsyncpa [#allocation5], 0
    %s16 = scalar_lea.sflag [#allocation5], 1
    %17 = vsyncpa %s16, 0
    loop: start=0, step=1, limit=6
    $region2: #{tpu_custom_call.1} parent=1 // loop_pre_header
      _
    $region3: #{tpu_custom_call.1} parent=1 // loop_header
      %s19 = sphi 0, %s23
      %p20 = scmp.ge.s32.totalorder %s19, 6
      %s26 = sphi 0, %s38
      %s27 = sphi 0, %s34
      %s28 = sphi 0, %s26
      %s29 = sphi 0, %s27
      %s30 = sphi 0, %s28
      %s31 = sphi 0, %s29
      %s43 = sphi 0, %s45
      %s46 = sphi 0, %s43
      %s47 = sphi 0, %s46
      %s63 = sphi 0, %s47
      %s69 = sphi 0, %s71
      %s72 = sphi 0, %s69
      %s73 = sphi 0, %s72
      %s89 = sphi 0, %s73
      %s93 = sphi 0, %s93
      %s95 = sphi 0, %s93
      %s96 = sphi 0, %s95
      %s110 = sphi 0, %s96
      %s114 = sphi 0, %s114
      %s116 = sphi 0, %s114
      %s117 = sphi 0, %s116
      %s131 = sphi 0, %s117
      %s137 = sphi 0, %s139
      %s140 = sphi 0, %s137
      %s141 = sphi 0, %s140
      %s157 = sphi 0, %s141
    $region4: #{tpu_custom_call.1} parent=1 // loop_header_branch
      %22 = sbr.rel (%p20) target = $region8
    $region5: #{tpu_custom_call.1} parent=1 // loop_body
      %s24 = ssub.s32 %s19, 1
      %s25 = ssub.s32 %s19, 2
      %s32 = sadd.s32 1, %s27
      %p33 = scmp.ge.s32.totalorder %s32, 2
      %s34 = scalar_select %p33, 0, %s32
      %s35 = sadd.s32 1, %s26
      %s36 = scalar_select %p33, %s35, %s26
      %p37 = scmp.ge.s32.totalorder %s36, 2
      %s38 = scalar_select %p37, 0, %s36
      %s39 = ssub.s32 %s26, %s38
      %s40 = ssub.s32 %s27, %s34
      %s41 = sor.u32 %s39, %s40
      %p42 = scmp.eq.s32.totalorder %s41, 0
      %s44 = sadd.s32 %s43, 1
      %s45 = scalar_select %p42, %s43, %s44
      %p48 = pneg %p42
      %p49 = scmp.eq.s32.totalorder %s19, 3
      %p50 = por %p48, %p49
      %p51 = scmp.ne.s32.totalorder %s43, %s46
      %p52 = scmp.eq.s32.totalorder %s19, 0
      %p53 = por %p51, %p52
      %p54 = scmp.ne.s32.totalorder %s43, %s46
      %p55 = scmp.eq.s32.totalorder %s24, 3
      %p56 = por %p54, %p55
      %p57 = scmp.ne.s32.totalorder %s46, %s47
      %p58 = scmp.eq.s32.totalorder %s24, 0
      %p59 = por %p57, %p58
      %p60 = scmp.ne.s32.totalorder %s46, %s47
      %p61 = scmp.eq.s32.totalorder %s25, 3
      %p62 = por %p60, %p61
      %p64 = scmp.ne.s32.totalorder %s47, %s63
      %p65 = scmp.eq.s32.totalorder %s25, 0
      %p66 = por %p64, %p65
      %s67 = ssub.s32 %s27, %s34
      %p68 = scmp.eq.s32.totalorder %s67, 0
      %s70 = sadd.s32 %s69, 1
      %s71 = scalar_select %p68, %s69, %s70
      %p74 = pneg %p68
      %p75 = scmp.eq.s32.totalorder %s19, 3
      %p76 = por %p74, %p75
      %p77 = scmp.ne.s32.totalorder %s69, %s72
      %p78 = scmp.eq.s32.totalorder %s19, 0
      %p79 = por %p77, %p78
      %p80 = scmp.ne.s32.totalorder %s69, %s72
      %p81 = scmp.eq.s32.totalorder %s24, 3
      %p82 = por %p80, %p81
      %p83 = scmp.ne.s32.totalorder %s72, %s73
      %p84 = scmp.eq.s32.totalorder %s24, 0
      %p85 = por %p83, %p84
      %p86 = scmp.ne.s32.totalorder %s72, %s73
      %p87 = scmp.eq.s32.totalorder %s25, 3
      %p88 = por %p86, %p87
      %p90 = scmp.ne.s32.totalorder %s73, %s89
      %p91 = scmp.eq.s32.totalorder %s25, 0
      %p92 = por %p90, %p91
      %s94 = sadd.s32 %s93, 1
      %p97 = scmp.eq.s32.totalorder %s19, 3
      %p98 = scmp.ne.s32.totalorder %s93, %s95
      %p99 = scmp.eq.s32.totalorder %s19, 0
      %p100 = por %p98, %p99
      %p101 = scmp.ne.s32.totalorder %s93, %s95
      %p102 = scmp.eq.s32.totalorder %s24, 3
      %p103 = por %p101, %p102
      %p104 = scmp.ne.s32.totalorder %s95, %s96
      %p105 = scmp.eq.s32.totalorder %s24, 0
      %p106 = por %p104, %p105
      %p107 = scmp.ne.s32.totalorder %s95, %s96
      %p108 = scmp.eq.s32.totalorder %s25, 3
      %p109 = por %p107, %p108
      %p111 = scmp.ne.s32.totalorder %s96, %s110
      %p112 = scmp.eq.s32.totalorder %s25, 0
      %p113 = por %p111, %p112
      %s115 = sadd.s32 %s114, 1
      %p118 = scmp.eq.s32.totalorder %s19, 3
      %p119 = scmp.ne.s32.totalorder %s114, %s116
      %p120 = scmp.eq.s32.totalorder %s19, 0
      %p121 = por %p119, %p120
      %p122 = scmp.ne.s32.totalorder %s114, %s116
      %p123 = scmp.eq.s32.totalorder %s24, 3
      %p124 = por %p122, %p123
      %p125 = scmp.ne.s32.totalorder %s116, %s117
      %p126 = scmp.eq.s32.totalorder %s24, 0
      %p127 = por %p125, %p126
      %p128 = scmp.ne.s32.totalorder %s116, %s117
      %p129 = scmp.eq.s32.totalorder %s25, 3
      %p130 = por %p128, %p129
      %p132 = scmp.ne.s32.totalorder %s117, %s131
      %p133 = scmp.eq.s32.totalorder %s25, 0
      %p134 = por %p132, %p133
      %s135 = ssub.s32 %s26, %s38
      %p136 = scmp.eq.s32.totalorder %s135, 0
      %s138 = sadd.s32 %s137, 1
      %s139 = scalar_select %p136, %s137, %s138
      %p142 = pneg %p136
      %p143 = scmp.eq.s32.totalorder %s19, 3
      %p144 = por %p142, %p143
      %p145 = scmp.ne.s32.totalorder %s137, %s140
      %p146 = scmp.eq.s32.totalorder %s19, 0
      %p147 = por %p145, %p146
      %p148 = scmp.ne.s32.totalorder %s137, %s140
      %p149 = scmp.eq.s32.totalorder %s24, 3
      %p150 = por %p148, %p149
      %p151 = scmp.ne.s32.totalorder %s140, %s141
      %p152 = scmp.eq.s32.totalorder %s24, 0
      %p153 = por %p151, %p152
      %p154 = scmp.ne.s32.totalorder %s140, %s141
      %p155 = scmp.eq.s32.totalorder %s25, 3
      %p156 = por %p154, %p155
      %p158 = scmp.ne.s32.totalorder %s141, %s157
      %p159 = scmp.eq.s32.totalorder %s25, 0
      %p160 = por %p158, %p159
      %p161 = scmp.le.s32.totalorder 1, %s19
      %p162 = scmp.lt.s32.totalorder %s19, 5
      %p163 = pnand %p161, %p162
      %p164 = pneg %p163
      // Predicated region
      $region9: #{tpu_custom_call.1} parent=5 // pred_check
        _
      $region10: #{tpu_custom_call.1} parent=5 // pred_check_branch
        %166 = sbr.rel (%p163) target = $region12
      $region11: #{tpu_custom_call.1} parent=5 // pred_region
        %s167 = ssub.s32 %s19, 1
        // Predicated region
        $region13: #{tpu_custom_call.1} parent=11 // pred_check
          %p168 = pneg %p106
        $region14: #{tpu_custom_call.1} parent=11 // pred_check_branch
          %170 = sbr.rel (%p168) target = $region16
        $region15: #{tpu_custom_call.1} parent=11 // pred_region
          %s172 = ssub.s32 256, 256
          %173 = vsyncadd [#allocation7], %s172
          %s174 = sshll.u32 [#allocation8], 4
          %s175 = int_to_ptr.vmem [resolvable:$true] %s174
          %180 = dma.hbm_to_vmem [thread:$0]  %s2, 256, %s175, [#allocation7], 64, 64, 4
        $region16: #{tpu_custom_call.1} parent=11 // pred_fallthru
          _
        // Predicated region
        $region17: #{tpu_custom_call.1} parent=11 // pred_check
          %p181 = pneg %p127
        $region18: #{tpu_custom_call.1} parent=11 // pred_check_branch
          %183 = sbr.rel (%p181) target = $region20
        $region19: #{tpu_custom_call.1} parent=11 // pred_region
          _
        $region20: #{tpu_custom_call.1} parent=11 // pred_fallthru
          _
      $region12: #{tpu_custom_call.1} parent=5 // pred_fallthru
        _
      %p184 = scmp.lt.s32.totalorder %s19, 4
      // Predicated region
      $region21: #{tpu_custom_call.1} parent=5 // pred_check
        %p185 = pneg %p184
      $region22: #{tpu_custom_call.1} parent=5 // pred_check_branch
        %187 = sbr.rel (%p185) target = $region24
      $region23: #{tpu_custom_call.1} parent=5 // pred_region
        // Predicated region
        $region25: #{tpu_custom_call.1} parent=23 // pred_check
          %p188 = pneg %p53
        $region26: #{tpu_custom_call.1} parent=23 // pred_check_branch
          %190 = sbr.rel (%p188) target = $region28
        $region27: #{tpu_custom_call.1} parent=23 // pred_region
          %s191 = sand.u32 %s43, 1
          %s192 = scalar_lea.sflag [#allocation4], %s191
          %s193 = sand.u32 %s43, 1
          %s194 = smul.addr %s193, 128
          %s195 = scalar_lea.vmem [#allocation3], %s194
          %s196 = smul.u32 4, %s27
          %s198 = ssub.s32 2048, 2048
          %199 = vsyncadd %s192, %s198
          %s200 = smul.addr %s26, 32
          %s201 = sadd.s32 %s196, %s200
          %s202 = smul.addr %s201, 128
          %s203 = scalar_lea.hbm %s0, %s202
          %s204 = sshll.u32 %s195, 4
          %s205 = int_to_ptr.vmem [resolvable:$true] %s204
          %210 = dma.hbm_to_vmem [thread:$0]  %s203, 2048, %s205, %s192, 1024, 512, 32
        $region28: #{tpu_custom_call.1} parent=23 // pred_fallthru
          _
        // Predicated region
        $region29: #{tpu_custom_call.1} parent=23 // pred_check
          %p211 = pneg %p79
        $region30: #{tpu_custom_call.1} parent=23 // pred_check_branch
          %213 = sbr.rel (%p211) target = $region32
        $region31: #{tpu_custom_call.1} parent=23 // pred_region
          %s214 = sand.u32 %s19, 1
          %s215 = scalar_lea.sflag [#allocation7], %s214
          %s216 = sand.u32 %s69, 1
          %s217 = smul.addr %s216, 16
          %s218 = scalar_lea.vmem [#allocation6], %s217
          %s219 = smul.u32 4, %s27
          %s221 = ssub.s32 256, 256
          %222 = vsyncadd %s215, %s221
          %s223 = smul.addr %s219, 64
          %s224 = scalar_lea.hbm %s1, %s223
          %s226 = sshll.u32 %s218, 4
          %s227 = int_to_ptr.vmem [resolvable:$true] %s226
          %229 = dma.hbm_to_vmem [thread:$0]  %s224, 256, %s227, %s215
        $region32: #{tpu_custom_call.1} parent=23 // pred_fallthru
          _
      $region24: #{tpu_custom_call.1} parent=5 // pred_fallthru
        _
      %p230 = scmp.le.s32.totalorder 1, %s19
      %p231 = scmp.lt.s32.totalorder %s19, 5
      %p232 = pnand %p230, %p231
      %p233 = pneg %p232
      // Predicated region
      $region33: #{tpu_custom_call.1} parent=5 // pred_check
        _
      $region34: #{tpu_custom_call.1} parent=5 // pred_check_branch
        %235 = sbr.rel (%p232) target = $region36
      $region35: #{tpu_custom_call.1} parent=5 // pred_region
        %s236 = ssub.s32 %s19, 1
        %s237 = sand.u32 %s46, 1
        %s238 = scalar_lea.sflag [#allocation4], %s237
        %s239 = sand.u32 %s46, 1
        %s240 = smul.addr %s239, 128
        %s241 = scalar_lea.vmem [#allocation3], %s240
        // Predicated region
        $region37: #{tpu_custom_call.1} parent=35 // pred_check
          %p242 = pneg %p59
        $region38: #{tpu_custom_call.1} parent=35 // pred_check_branch
          %244 = sbr.rel (%p242) target = $region40
        $region39: #{tpu_custom_call.1} parent=35 // pred_region
          %245 = dma.done %s238, 2048
        $region40: #{tpu_custom_call.1} parent=35 // pred_fallthru
          _
        %s246 = sand.u32 %s24, 1
        %s247 = scalar_lea.sflag [#allocation7], %s246
        %s248 = sand.u32 %s72, 1
        %s249 = smul.addr %s248, 16
        %s250 = scalar_lea.vmem [#allocation6], %s249
        // Predicated region
        $region41: #{tpu_custom_call.1} parent=35 // pred_check
          %p251 = pneg %p85
        $region42: #{tpu_custom_call.1} parent=35 // pred_check_branch
          %253 = sbr.rel (%p251) target = $region44
        $region43: #{tpu_custom_call.1} parent=35 // pred_region
          %254 = dma.done %s247, 256
        $region44: #{tpu_custom_call.1} parent=35 // pred_fallthru
          _
        // Predicated region
        $region45: #{tpu_custom_call.1} parent=35 // pred_check
          %p255 = pneg %p106
        $region46: #{tpu_custom_call.1} parent=35 // pred_check_branch
          %257 = sbr.rel (%p255) target = $region48
        $region47: #{tpu_custom_call.1} parent=35 // pred_region
          %258 = dma.done [#allocation7], 256
        $region48: #{tpu_custom_call.1} parent=35 // pred_fallthru
          _
        %s259 = sand.u32 %s46, 1
        %s260 = scalar_lea.sflag [#allocation4], %s259
        %s261 = sand.u32 %s46, 1
        %s262 = smul.addr %s261, 128
        %s263 = scalar_lea.vmem [#allocation3], %s262
        %p264 = pneg %p59
        %p265 = pneg %p56
        %s266 = sand.u32 %s24, 1
        %s267 = scalar_lea.sflag [#allocation7], %s266
        %s268 = sand.u32 %s72, 1
        %s269 = smul.addr %s268, 16
        %s270 = scalar_lea.vmem [#allocation6], %s269
        %p271 = pneg %p85
        %p272 = pneg %p82
        %p273 = pneg %p106
        %p274 = pneg %p103
        %p275 = pneg %p127
        %p276 = pneg %p124
        %p277 = pneg %p153
        %p278 = pneg %p150
        %s279 = sand.u32 %s140, 1
        %s280 = scalar_lea.sflag [#allocation5], %s279
        %s281 = sand.u32 %s140, 1
        %s282 = smul.addr %s281, 8
        %s283 = scalar_lea.vmem [#allocation9], %s282
        %s284 = smul.u32 4, %s29
        %s285 = smul.u32 4, %s29
        %p287 = scmp.eq.s32.totalorder %s29, 0
        // Predicated region
        $region49: #{tpu_custom_call.1} parent=35 // pred_check
          %p288 = pneg %p287
        $region50: #{tpu_custom_call.1} parent=35 // pred_check_branch
          %290 = sbr.rel (%p288) target = $region52
        $region51: #{tpu_custom_call.1} parent=35 // pred_region
          %vm291 = vcmask 261120
          %292 = vst.msk [vmem:[#allocation2] sm:$0xff] %vm291, 0.0
        $region52: #{tpu_custom_call.1} parent=35 // pred_fallthru
          _
        %v293 = vld [vmem:[%s241] sm:$0xff]
        %v294 = vld [vmem:[%s241 + $0x8] sm:$0xff]
        %v295 = vld [vmem:[%s241 + $0x10] sm:$0xff]
        %v296 = vld [vmem:[%s241 + $0x18] sm:$0xff]
        %v297 = vld [vmem:[%s241 + $0x20] sm:$0xff]
        %v298 = vld [vmem:[%s241 + $0x28] sm:$0xff]
        %v299 = vld [vmem:[%s241 + $0x30] sm:$0xff]
        %v300 = vld [vmem:[%s241 + $0x38] sm:$0xff]
        %v301 = vld [vmem:[%s241 + $0x40] sm:$0xff]
        %v302 = vld [vmem:[%s241 + $0x48] sm:$0xff]
        %v303 = vld [vmem:[%s241 + $0x50] sm:$0xff]
        %v304 = vld [vmem:[%s241 + $0x58] sm:$0xff]
        %v305 = vld [vmem:[%s241 + $0x60] sm:$0xff]
        %v306 = vld [vmem:[%s241 + $0x68] sm:$0xff]
        %v307 = vld [vmem:[%s241 + $0x70] sm:$0xff]
        %v308 = vld [vmem:[%s241 + $0x78] sm:$0xff]
        %v309 = vpack.c.bf16 %v297, %v293
        %v310 = vpack.c.bf16 %v298, %v294
        %v311 = vpack.c.bf16 %v299, %v295
        %v312 = vpack.c.bf16 %v300, %v296
        %v313 = vpack.c.bf16 %v305, %v301
        %v314 = vpack.c.bf16 %v306, %v302
        %v315 = vpack.c.bf16 %v307, %v303
        %v316 = vpack.c.bf16 %v308, %v304
        %v317 = vld [vmem:[#allocation2] sm:$0xff]
        %v318 = vld [vmem:[%s250] sm:$0xff]
        %v319 = vld [vmem:[%s250 + $0x8] sm:$0xff]
        %v322 = vunpack.c.l.b16 %v318
        %v323 = vunpack.c.h.b16 %v318
        %v324 = vunpack.c.l.b16 %v319
        %v325 = vunpack.c.h.b16 %v319
        %v326 = vpack.c.b16 %v322, %v322
        %v327 = vpack.c.b16 %v323, %v323
        %v328 = vpack.c.b16 %v324, %v324
        %v329 = vpack.c.b16 %v325, %v325
        %334 = vmatprep.subr.bf16.mxu0 0
        %335 = vmatpush1.bf16.xpose.msra.mxu0 0
        %336 = vmatprep.subr.bf16.mxu0 0
        %337 = vmatpush1.bf16.xpose.msra.mxu0 0
        %338 = vmatprep.subr.bf16.mxu0 0
        %339 = vmatpush1.bf16.xpose.msra.mxu0 0
        %340 = vmatprep.subr.bf16.mxu0 0
        %341 = vmatpush1.bf16.xpose.msra.mxu0 0
        %342 = vmatprep.subr.bf16.mxu0 0
        %343 = vmatpush1.bf16.xpose.msra.mxu0 0
        %344 = vmatprep.subr.bf16.mxu0 0
        %345 = vmatpush1.bf16.xpose.msra.mxu0 0
        %346 = vmatprep.subr.bf16.mxu0 %v314
        %347 = vmatpush1.bf16.xpose.msra.mxu0 %v313
        %348 = vmatprep.subr.bf16.mxu0 %v310
        %349 = vmatpush1.bf16.xpose.msra.mxu0 %v309
        %350 = vmatprep.subr.bf16.mxu0 0
        %351 = vmatpush2.bf16.xpose.msra.mxu0 0
        %352 = vmatprep.subr.bf16.mxu0 0
        %353 = vmatpush2.bf16.xpose.msra.mxu0 0
        %354 = vmatprep.subr.bf16.mxu0 0
        %355 = vmatpush2.bf16.xpose.msra.mxu0 0
        %356 = vmatprep.subr.bf16.mxu0 0
        %357 = vmatpush2.bf16.xpose.msra.mxu0 0
        %358 = vmatprep.subr.bf16.mxu0 0
        %359 = vmatpush2.bf16.xpose.msra.mxu0 0
        %360 = vmatprep.subr.bf16.mxu0 0
        %361 = vmatpush2.bf16.xpose.msra.mxu0 0
        %362 = vmatprep.subr.bf16.mxu0 0
        %363 = vmatpush2.bf16.xpose.msra.mxu0 0
        %364 = vmatprep.subr.bf16.mxu0 0
        %365 = vmatpush2.bf16.xpose.msra.mxu0 0
        %366 = vmatprep.mubr.bf16.mxu0 %v327
        %367 = vmatmul.mubr.bf16.gmra.mxu0 %v326
        %v368 = vpop.f32.mrf.mxu0
        %v369 = vadd.f32 0.0, %v368
        %v370 = vpop.f32.mrf.mxu0
        %v371 = vpop.f32.mrf.mxu0
        %v372 = vpop.f32.mrf.mxu0
        %373 = vdwg.mxu0
        %374 = vmatprep.subr.bf16.mxu0 0
        %375 = vmatpush1.bf16.xpose.msra.mxu0 0
        %376 = vmatprep.subr.bf16.mxu0 0
        %377 = vmatpush1.bf16.xpose.msra.mxu0 0
        %378 = vmatprep.subr.bf16.mxu0 0
        %379 = vmatpush1.bf16.xpose.msra.mxu0 0
        %380 = vmatprep.subr.bf16.mxu0 0
        %381 = vmatpush1.bf16.xpose.msra.mxu0 0
        %382 = vmatprep.subr.bf16.mxu0 0
        %383 = vmatpush1.bf16.xpose.msra.mxu0 0
        %384 = vmatprep.subr.bf16.mxu0 0
        %385 = vmatpush1.bf16.xpose.msra.mxu0 0
        %386 = vmatprep.subr.bf16.mxu0 %v316
        %387 = vmatpush1.bf16.xpose.msra.mxu0 %v315
        %388 = vmatprep.subr.bf16.mxu0 %v312
        %389 = vmatpush1.bf16.xpose.msra.mxu0 %v311
        %390 = vmatprep.subr.bf16.mxu0 0
        %391 = vmatpush2.bf16.xpose.msra.mxu0 0
        %392 = vmatprep.subr.bf16.mxu0 0
        %393 = vmatpush2.bf16.xpose.msra.mxu0 0
        %394 = vmatprep.subr.bf16.mxu0 0
        %395 = vmatpush2.bf16.xpose.msra.mxu0 0
        %396 = vmatprep.subr.bf16.mxu0 0
        %397 = vmatpush2.bf16.xpose.msra.mxu0 0
        %398 = vmatprep.subr.bf16.mxu0 0
        %399 = vmatpush2.bf16.xpose.msra.mxu0 0
        %400 = vmatprep.subr.bf16.mxu0 0
        %401 = vmatpush2.bf16.xpose.msra.mxu0 0
        %402 = vmatprep.subr.bf16.mxu0 0
        %403 = vmatpush2.bf16.xpose.msra.mxu0 0
        %404 = vmatprep.subr.bf16.mxu0 0
        %405 = vmatpush2.bf16.xpose.msra.mxu0 0
        %406 = vmatprep.mubr.bf16.mxu0 %v329
        %407 = vmatmul.mubr.bf16.gmra.mxu0 %v328
        %v408 = vpop.f32.mrf.mxu0
        %v409 = vadd.f32 %v369, %v408
        %v410 = vpop.f32.mrf.mxu0
        %v411 = vpop.f32.mrf.mxu0
        %v412 = vpop.f32.mrf.mxu0
        %413 = vdwg.mxu0
        %v414 = vadd.f32 %v317, %v409
        %vm415 = vcmask 261120
        %416 = vst.msk [vmem:[#allocation2] sm:$0xff] %vm415, %v414
        %p417 = scmp.eq.s32.totalorder %s29, 1
        // Predicated region
        $region53: #{tpu_custom_call.1} parent=35 // pred_check
          %p418 = pneg %p417
        $region54: #{tpu_custom_call.1} parent=35 // pred_check_branch
          %420 = sbr.rel (%p418) target = $region56
        $region55: #{tpu_custom_call.1} parent=35 // pred_region
          %v421 = vld [vmem:[#allocation2] sm:$0xff]
          %v422 = vpack.c.bf16 %v421, %v421
          %v423 = vld [vmem:[#allocation8] sm:$0xf]
          %v424 = vld [vmem:[#allocation8 + $0x4] sm:$0xf]
          %v425 = vld [vmem:[#allocation8 + $0x8] sm:$0xf]
          %v426 = vld [vmem:[#allocation8 + $0xc] sm:$0xf]
          %v427 = vld [vmem:[%s3] sm:$0x1]
          %v429 = vlaneseq
          %v430 = vshrl.u32 %v429, 7
          %v431 = vsub.s32 0, %v430
          %v432 = vrot.slane %v427, %v431
          %v438 = vunpack.c.l.b16 %v423
          %v439 = vunpack.c.l.b16 %v424
          %v440 = vunpack.c.l.b16 %v425
          %v441 = vunpack.c.l.b16 %v426
          %v442 = vpack.c.b16 %v439, %v438
          %v443 = vpack.c.b16 %v441, %v440
          %v447 = vsel %vm415, %v422, 0
          %449 = vmatprep.subr.bf16.mxu0 0
          %450 = vmatpush1.bf16.msra.mxu0 0
          %451 = vmatprep.subr.bf16.mxu0 0
          %452 = vmatpush1.bf16.msra.mxu0 0
          %453 = vmatprep.subr.bf16.mxu0 0
          %454 = vmatpush1.bf16.msra.mxu0 0
          %455 = vmatprep.subr.bf16.mxu0 0
          %456 = vmatpush1.bf16.msra.mxu0 0
          %457 = vmatprep.subr.bf16.mxu0 0
          %458 = vmatpush1.bf16.msra.mxu0 0
          %459 = vmatprep.subr.bf16.mxu0 0
          %460 = vmatpush1.bf16.msra.mxu0 0
          %461 = vmatprep.subr.bf16.mxu0 0
          %462 = vmatpush1.bf16.msra.mxu0 %v443
          %463 = vmatprep.subr.bf16.mxu0 0
          %464 = vmatpush1.bf16.msra.mxu0 %v442
          %465 = vmatprep.subr.bf16.mxu0 0
          %466 = vmatpush2.bf16.msra.mxu0 0
          %467 = vmatprep.subr.bf16.mxu0 0
          %468 = vmatpush2.bf16.msra.mxu0 0
          %469 = vmatprep.subr.bf16.mxu0 0
          %470 = vmatpush2.bf16.msra.mxu0 0
          %471 = vmatprep.subr.bf16.mxu0 0
          %472 = vmatpush2.bf16.msra.mxu0 0
          %473 = vmatprep.subr.bf16.mxu0 0
          %474 = vmatpush2.bf16.msra.mxu0 0
          %475 = vmatprep.subr.bf16.mxu0 0
          %476 = vmatpush2.bf16.msra.mxu0 0
          %477 = vmatprep.subr.bf16.mxu0 0
          %478 = vmatpush2.bf16.msra.mxu0 0
          %479 = vmatprep.subr.bf16.mxu0 0
          %480 = vmatpush2.bf16.msra.mxu0 0
          %481 = vmatprep.mubr.bf16.mxu0 0
          %482 = vmatmul.mubr.bf16.gmra.mxu0 %v447
          %v483 = vpop.f32.mrf.mxu0
          %v484 = vadd.f32 %v432, %v483
          %v485 = vpop.f32.mrf.mxu0
          %v486 = vpop.f32.mrf.mxu0
          %v487 = vpop.f32.mrf.mxu0
          %488 = vdwg.mxu0
          %v489 = vmax.f32 %v484, 0.0
          %490 = vst [vmem:[%s283] sm:$0xff] %v489
        $region56: #{tpu_custom_call.1} parent=35 // pred_fallthru
          _
        %s491 = sand.u32 %s140, 1
        %s492 = scalar_lea.sflag [#allocation5], %s491
        %s493 = sand.u32 %s140, 1
        %s494 = smul.addr %s493, 8
        %s495 = scalar_lea.vmem [#allocation9], %s494
        // Predicated region
        $region57: #{tpu_custom_call.1} parent=35 // pred_check
          %p496 = pneg %p150
        $region58: #{tpu_custom_call.1} parent=35 // pred_check_branch
          %498 = sbr.rel (%p496) target = $region60
        $region59: #{tpu_custom_call.1} parent=35 // pred_region
          %s500 = ssub.s32 128, 128
          %501 = vsyncadd %s492, %s500
          %s502 = smul.addr %s28, 128
          %s503 = scalar_lea.hbm %s4, %s502
          %s505 = sshll.u32 %s495, 4
          %s506 = int_to_ptr.vmem [resolvable:$true] %s505
          %508 = dma.vmem_to_hbm [thread:$0]  %s506, 128, %s503, %s492
        $region60: #{tpu_custom_call.1} parent=35 // pred_fallthru
          _
      $region36: #{tpu_custom_call.1} parent=5 // pred_fallthru
        _
      %p509 = scmp.le.s32.totalorder 2, %s19
      // Predicated region
      $region61: #{tpu_custom_call.1} parent=5 // pred_check
        %p510 = pneg %p509
      $region62: #{tpu_custom_call.1} parent=5 // pred_check_branch
        %512 = sbr.rel (%p510) target = $region64
      $region63: #{tpu_custom_call.1} parent=5 // pred_region
        %s513 = ssub.s32 %s19, 2
        // Predicated region
        $region65: #{tpu_custom_call.1} parent=63 // pred_check
          %p514 = pneg %p156
        $region66: #{tpu_custom_call.1} parent=63 // pred_check_branch
          %516 = sbr.rel (%p514) target = $region68
        $region67: #{tpu_custom_call.1} parent=63 // pred_region
          %s517 = sand.u32 %s141, 1
          %s518 = scalar_lea.sflag [#allocation5], %s517
          %s519 = sand.u32 %s141, 1
          %s520 = smul.addr %s519, 8
          %s521 = scalar_lea.vmem [#allocation9], %s520
          %522 = dma.done %s518, 128
        $region68: #{tpu_custom_call.1} parent=63 // pred_fallthru
          _
      $region64: #{tpu_custom_call.1} parent=5 // pred_fallthru
        _
    $region6: #{tpu_custom_call.1} parent=1 // loop_footer
      %s23 = sadd.s32 1, %s19
    $region7: #{tpu_custom_call.1} parent=1 // loop_footer_branch
      %18 = sbr.rel target = $region3
    $region8: #{tpu_custom_call.1} parent=1 // loop_exit
      _
    %523 = vsyncpa [#allocation4], 1
    %s524 = scalar_lea.sflag [#allocation4], 1
    %525 = vsyncpa %s524, 1
    %526 = vsyncpa [#allocation7], 1
    %s527 = scalar_lea.sflag [#allocation7], 1
    %528 = vsyncpa %s527, 1
    %529 = vsyncpa [#allocation5], 1
    %s530 = scalar_lea.sflag [#allocation5], 1
    %531 = vsyncpa %s530, 1

</llo_original>
